<compile_context>
chip_gen: v5e
topology: v5e:2x2
jax: 0.10.0
libtpu: 0.0.40
codegen_flags: <defaults>
</compile_context>

<pallas_src>
import functools

import jax
import jax.numpy as jnp
from jax.experimental import pallas as pl
from jax.experimental.pallas import tpu as pltpu


def _trust_kernel(xt_ref, w1_ref, b1_ref, w2_ref, b2_ref, w3_ref, b3_ref, o_ref):
    # Layer 1 (transposed): h1^T = relu(W1 @ x^T + b1)      -> (H1, bb)
    h1 = jnp.dot(w1_ref[...], xt_ref[...], preferred_element_type=jnp.float32)
    h1 = jnp.maximum(h1 + b1_ref[...], 0.0)

    # Layer 2: h2^T = relu(W2 @ h1^T + b2)                  -> (H2, bb)
    h2 = jnp.dot(w2_ref[...], h1.astype(jnp.bfloat16),
                 preferred_element_type=jnp.float32)
    h2 = jnp.maximum(h2 + b2_ref[...], 0.0)

    # Layer 3 (H2 -> 1): VPU multiply + sublane reduce, no N=1 MXU matmul.
    z = jnp.sum(h2 * w3_ref[...], axis=0, keepdims=True) + b3_ref[...]
    o_ref[...] = jax.nn.sigmoid(z).astype(o_ref.dtype)     # (1, bb) lane-dense


def _round_up(v, m):
    return ((v + m - 1) // m) * m


@functools.partial(jax.jit, static_argnames=("block_b",))
def trust_network_forward(x, params, block_b=1024):
    """Fused MLP forward.

    x: (B, F) float32; params in PyTorch nn.Linear layout:
       (w1 (H1,F), b1 (H1,), w2 (H2,H1), b2 (H2,), w3 (1,H2), b3 (1,)).
    Returns (B, 1) float32 trust scores.
    """
    w1, b1, w2, b2, w3, b3 = params
    B, F = x.shape
    H1 = w1.shape[0]
    H2 = w2.shape[0]

    # Batch tile: multiple of 128 (lane-dense), large enough to amortize the
    # per-grid-step overhead, small enough to leave >=2 tiles for the v7x
    # megacore when the batch allows it.
    b_ceil = _round_up(B, 128)
    target = b_ceil if b_ceil < 256 else _round_up(b_ceil // 2, 128)
    bb = max(128, (min(block_b, target) // 128) * 128)
    B_pad = _round_up(B, bb)
    grid = (B_pad // bb,)

    # Lane-major (transposed) activations: batch on the lane axis everywhere.
    xt = jnp.pad(x, ((0, B_pad - B), (0, 0))).T.astype(jnp.bfloat16)  # (F, B_pad)

    w1b = w1.astype(jnp.bfloat16)                        # (H1, F)
    w2b = w2.astype(jnp.bfloat16)                        # (H2, H1)
    b1c = b1.reshape(H1, 1).astype(jnp.float32)
    b2c = b2.reshape(H2, 1).astype(jnp.float32)
    w3c = w3.reshape(H2, 1).astype(jnp.float32)          # VPU operand, keep f32
    b3c = b3.reshape(1, 1).astype(jnp.float32)

    def rep(shape):
        return pl.BlockSpec(shape, lambda i: (0,) * len(shape))

    out_t = pl.pallas_call(
        _trust_kernel,
        out_shape=jax.ShapeDtypeStruct((1, B_pad), jnp.float32),
        grid_spec=pltpu.PrefetchScalarGridSpec(
            num_scalar_prefetch=0,
            grid=grid,
            in_specs=[
                pl.BlockSpec((F, bb), lambda i: (0, i)),   # x^T tile (bf16)
                rep((H1, F)),    # W1 (bf16)
                rep((H1, 1)),    # b1
                rep((H2, H1)),   # W2 (bf16)
                rep((H2, 1)),    # b2
                rep((H2, 1)),    # w3 as a column
                rep((1, 1)),     # b3
            ],
            out_specs=pl.BlockSpec((1, bb), lambda i: (0, i)),
        ),
        compiler_params=pltpu.CompilerParams(
            dimension_semantics=("parallel",)
        ),
    )(xt, w1b, b1c, w2b, b2c, w3c, b3c)

    return out_t[0, :B].reshape(B, 1)


def init_params(input_size, hidden_layers, key):
    """Deterministic parameter init in PyTorch nn.Linear (out,in) layout."""
    sizes = [input_size] + list(hidden_layers) + [1]
    params = []
    for i in range(len(sizes) - 1):
        fan_in, fan_out = sizes[i], sizes[i + 1]
        key, kw, kb = jax.random.split(key, 3)
        bound = 1.0 / jnp.sqrt(jnp.float32(fan_in))
        w = jax.random.uniform(kw, (fan_out, fan_in), jnp.float32, -bound, bound)
        b = jax.random.uniform(kb, (fan_out,), jnp.float32, -bound, bound)
        params.extend([w, b])
    return tuple(params)


def reference_forward(x, params):
    w1, b1, w2, b2, w3, b3 = params
    h1 = jnp.maximum(x @ w1.T + b1, 0.0)
    h2 = jnp.maximum(h1 @ w2.T + b2, 0.0)
    return jax.nn.sigmoid(h2 @ w3.T + b3)


if __name__ == "__main__":
    key = jax.random.PRNGKey(0)
    key_x, key_p = jax.random.split(key)

    batch = 8
    input_size = 16
    hidden_layers = [64, 32]

    x = jax.random.normal(key_x, (batch, input_size), jnp.float32)
    params = init_params(input_size, hidden_layers, key_p)

    out = trust_network_forward(x, params)
    out = jax.block_until_ready(out)

    ref = reference_forward(x, params)
    assert out.shape == (batch, 1), out.shape
    # bf16 matmul operands -> slightly looser tolerance vs the f32 reference.
    assert jnp.allclose(out, ref, atol=2e-2, rtol=0.0), (out, ref)

    print("KERNEL_OK")
</pallas_src>

<mosaic_0001>
module attributes {stable_mosaic.version = 11 : i64} {
  func.func @_trust_kernel(%arg0: i32, %arg1: memref<16x128xbf16, #tpu.memory_space<vmem>>, %arg2: memref<64x16xbf16, #tpu.memory_space<vmem>>, %arg3: memref<64x1xf32, #tpu.memory_space<vmem>>, %arg4: memref<32x64xbf16, #tpu.memory_space<vmem>>, %arg5: memref<32x1xf32, #tpu.memory_space<vmem>>, %arg6: memref<32x1xf32, #tpu.memory_space<vmem>>, %arg7: memref<1x1xf32, #tpu.memory_space<vmem>>, %arg8: memref<1x128xf32, #tpu.memory_space<vmem>>) attributes {dimension_semantics = [#tpu.dimension_semantics<parallel>], iteration_bounds = array<i64: 1>, scalar_prefetch = 0 : i64, scratch_operands = 0 : i64, tpu.core_type = #tpu.core_type<tc>, window_params = [{transform_indices = @transform_0, window_bounds = array<i64: 16, 128>}, {pipeline_mode = #tpu.pipeline_mode<synchronous>, transform_indices = @transform_1, window_bounds = array<i64: 64, 16>}, {pipeline_mode = #tpu.pipeline_mode<synchronous>, transform_indices = @transform_2, window_bounds = array<i64: 64, 1>}, {pipeline_mode = #tpu.pipeline_mode<synchronous>, transform_indices = @transform_3, window_bounds = array<i64: 32, 64>}, {pipeline_mode = #tpu.pipeline_mode<synchronous>, transform_indices = @transform_4, window_bounds = array<i64: 32, 1>}, {pipeline_mode = #tpu.pipeline_mode<synchronous>, transform_indices = @transform_5, window_bounds = array<i64: 32, 1>}, {pipeline_mode = #tpu.pipeline_mode<synchronous>, transform_indices = @transform_6, window_bounds = array<i64: 1, 1>}, {transform_indices = @transform_7, window_bounds = array<i64: 1, 128>}]} {
    %c0 = arith.constant 0 : index
    %c0_0 = arith.constant 0 : index
    %0 = vector.load %arg2[%c0, %c0_0] : memref<64x16xbf16, #tpu.memory_space<vmem>>, vector<64x16xbf16>
    %c0_1 = arith.constant 0 : index
    %c0_2 = arith.constant 0 : index
    %1 = vector.load %arg1[%c0_1, %c0_2] : memref<16x128xbf16, #tpu.memory_space<vmem>>, vector<16x128xbf16>
    %cst = arith.constant dense<0.000000e+00> : vector<64x128xf32>
    %2 = tpu.matmul %0, %1, %cst {dimension_numbers = #tpu.dot_dimension_numbers<[1], [0], [0], [1], [0, 0, 1, 1], [], []>} : vector<64x16xbf16>, vector<16x128xbf16>, vector<64x128xf32> -> vector<64x128xf32>
    %c0_3 = arith.constant 0 : index
    %c0_4 = arith.constant 0 : index
    %3 = vector.load %arg3[%c0_3, %c0_4] : memref<64x1xf32, #tpu.memory_space<vmem>>, vector<64x1xf32>
    %4 = vector.broadcast %3 : vector<64x1xf32> to vector<64x128xf32>
    %5 = arith.addf %2, %4 : vector<64x128xf32>
    %cst_5 = arith.constant 0.000000e+00 : f32
    %6 = vector.broadcast %cst_5 : f32 to vector<64x128xf32>
    %7 = arith.maximumf %5, %6 : vector<64x128xf32>
    %c0_6 = arith.constant 0 : index
    %c0_7 = arith.constant 0 : index
    %8 = vector.load %arg4[%c0_6, %c0_7] : memref<32x64xbf16, #tpu.memory_space<vmem>>, vector<32x64xbf16>
    %9 = arith.truncf %7 : vector<64x128xf32> to vector<64x128xbf16>
    %cst_8 = arith.constant dense<0.000000e+00> : vector<32x128xf32>
    %10 = tpu.matmul %8, %9, %cst_8 {dimension_numbers = #tpu.dot_dimension_numbers<[1], [0], [0], [1], [0, 0, 1, 1], [], []>} : vector<32x64xbf16>, vector<64x128xbf16>, vector<32x128xf32> -> vector<32x128xf32>
    %c0_9 = arith.constant 0 : index
    %c0_10 = arith.constant 0 : index
    %11 = vector.load %arg5[%c0_9, %c0_10] : memref<32x1xf32, #tpu.memory_space<vmem>>, vector<32x1xf32>
    %12 = vector.broadcast %11 : vector<32x1xf32> to vector<32x128xf32>
    %13 = arith.addf %10, %12 : vector<32x128xf32>
    %cst_11 = arith.constant 0.000000e+00 : f32
    %14 = vector.broadcast %cst_11 : f32 to vector<32x128xf32>
    %15 = arith.maximumf %13, %14 : vector<32x128xf32>
    %c0_12 = arith.constant 0 : index
    %c0_13 = arith.constant 0 : index
    %16 = vector.load %arg6[%c0_12, %c0_13] : memref<32x1xf32, #tpu.memory_space<vmem>>, vector<32x1xf32>
    %17 = vector.broadcast %16 : vector<32x1xf32> to vector<32x128xf32>
    %18 = arith.mulf %15, %17 : vector<32x128xf32>
    %cst_14 = arith.constant dense<0.000000e+00> : vector<128xf32>
    %19 = vector.multi_reduction <add>, %18, %cst_14 [0] : vector<32x128xf32> to vector<128xf32>
    %20 = vector.shape_cast %19 : vector<128xf32> to vector<1x128xf32>
    %c0_15 = arith.constant 0 : index
    %c0_16 = arith.constant 0 : index
    %21 = vector.load %arg7[%c0_15, %c0_16] : memref<1x1xf32, #tpu.memory_space<vmem>>, vector<1x1xf32>
    %22 = vector.broadcast %21 : vector<1x1xf32> to vector<1x128xf32>
    %23 = arith.addf %20, %22 : vector<1x128xf32>
    %24 = arith.negf %23 : vector<1x128xf32>
    %25 = math.exp %24 : vector<1x128xf32>
    %cst_17 = arith.constant 1.000000e+00 : f32
    %26 = vector.broadcast %cst_17 : f32 to vector<1x128xf32>
    %27 = arith.addf %26, %25 : vector<1x128xf32>
    %28 = arith.divf %26, %27 : vector<1x128xf32>
    %c0_18 = arith.constant 0 : index
    %c0_19 = arith.constant 0 : index
    %29 = vector.load %arg8[%c0_18, %c0_19] : memref<1x128xf32, #tpu.memory_space<vmem>>, vector<1x128xf32>
    tpu.vector_store %arg8[%c0_18, %c0_19], %28 {strides = array<i32>} : memref<1x128xf32, #tpu.memory_space<vmem>>, vector<1x128xf32>,
    return
  }
  func.func @transform_0(%arg0: i32) -> (i32, i32) {
    %c0_i32 = arith.constant 0 : i32
    %c0_i32_0 = arith.constant 0 : i32
    return %c0_i32, %arg0 : i32, i32
  }
  func.func @transform_1(%arg0: i32) -> (i32, i32) {
    %c0_i32 = arith.constant 0 : i32
    %c0_i32_0 = arith.constant 0 : i32
    %c0_i32_1 = arith.constant 0 : i32
    return %c0_i32, %c0_i32_0 : i32, i32
  }
  func.func @transform_2(%arg0: i32) -> (i32, i32) {
    %c0_i32 = arith.constant 0 : i32
    %c0_i32_0 = arith.constant 0 : i32
    %c0_i32_1 = arith.constant 0 : i32
    return %c0_i32, %c0_i32_0 : i32, i32
  }
  func.func @transform_3(%arg0: i32) -> (i32, i32) {
    %c0_i32 = arith.constant 0 : i32
    %c0_i32_0 = arith.constant 0 : i32
    %c0_i32_1 = arith.constant 0 : i32
    return %c0_i32, %c0_i32_0 : i32, i32
  }
  func.func @transform_4(%arg0: i32) -> (i32, i32) {
    %c0_i32 = arith.constant 0 : i32
    %c0_i32_0 = arith.constant 0 : i32
    %c0_i32_1 = arith.constant 0 : i32
    return %c0_i32, %c0_i32_0 : i32, i32
  }
  func.func @transform_5(%arg0: i32) -> (i32, i32) {
    %c0_i32 = arith.constant 0 : i32
    %c0_i32_0 = arith.constant 0 : i32
    %c0_i32_1 = arith.constant 0 : i32
    return %c0_i32, %c0_i32_0 : i32, i32
  }
  func.func @transform_6(%arg0: i32) -> (i32, i32) {
    %c0_i32 = arith.constant 0 : i32
    %c0_i32_0 = arith.constant 0 : i32
    %c0_i32_1 = arith.constant 0 : i32
    return %c0_i32, %c0_i32_0 : i32, i32
  }
  func.func @transform_7(%arg0: i32) -> (i32, i32) {
    %c0_i32 = arith.constant 0 : i32
    %c0_i32_0 = arith.constant 0 : i32
    return %c0_i32, %arg0 : i32, i32
  }
}

</mosaic_0001>

<llo_original>
// kernel: trust_network_forward.1
$region0: #{trust_network_forward.1}
  #allocation0 [shape = 'u32[]', space=smem, size = 0x4, offset = 0x4, fixed_abs, tag = 'smem constant byte address 0x4 - core index']
  #allocation1 [shape = 'u32[72,128]{1,0:T(1,128)}', space=vmem, size = 0x9000, scoped, tag = 'internal scratch']
  #allocation2 [shape = 'f32[1,1]{1,0:T(1,128)S(1)}', space=vmem, size = 0x200, scoped, tag = 'scoped memory for trust_network_forward.1']
  %s0 = inlined_call_operand.vmem [shape: bf16[16,128], index: 0, kind: input, shape index: {}]
  %s1 = inlined_call_operand.vmem [shape: bf16[64,16], index: 1, kind: input, shape index: {}]
  %s2 = inlined_call_operand.vmem [shape: f32[64,1], index: 2, kind: input, shape index: {}]
  %s3 = inlined_call_operand.vmem [shape: bf16[32,64], index: 3, kind: input, shape index: {}]
  %s4 = inlined_call_operand.vmem [shape: f32[32,1], index: 4, kind: input, shape index: {}]
  %s5 = inlined_call_operand.vmem [shape: f32[32,1], index: 5, kind: input, shape index: {}]
  %s6 = inlined_call_operand.<no memory space> [shape: f32[1,1], index: 6, kind: input, shape index: {}]
  %s7 = inlined_call_operand.vmem [shape: f32[1,128], index: 7, kind: output, shape index: {}]
  %s8 = sld [smem:[#allocation0]]
  $region38: #{trust_network_forward.1} parent=0
    _
  %s10 = ssub.s32 1, %s8
  %s11 = scalar_select 0, %s10, %s8
  %v12 = vstv %s6
  %13 = vst [vmem:[#allocation2] sm:$0x1] %v12
  // Predicated region
  $region2: #{trust_network_forward.1} parent=0 // pred_check
    _
  $region3: #{trust_network_forward.1} parent=0 // pred_check_branch
    %15 = sbr.rel (0) target = $region5
  $region4: #{trust_network_forward.1} parent=0 // pred_region
    _
  $region5: #{trust_network_forward.1} parent=0 // pred_fallthru
    _
  // Predicated region
  $region6: #{trust_network_forward.1} parent=0 // pred_check
    _
  $region7: #{trust_network_forward.1} parent=0 // pred_check_branch
    %17 = sbr.rel (0) target = $region9
  $region8: #{trust_network_forward.1} parent=0 // pred_region
    _
  $region9: #{trust_network_forward.1} parent=0 // pred_fallthru
    _
  // Predicated region
  $region10: #{trust_network_forward.1} parent=0 // pred_check
    _
  $region11: #{trust_network_forward.1} parent=0 // pred_check_branch
    %19 = sbr.rel (0) target = $region13
  $region12: #{trust_network_forward.1} parent=0 // pred_region
    _
  $region13: #{trust_network_forward.1} parent=0 // pred_fallthru
    _
  // Predicated region
  $region14: #{trust_network_forward.1} parent=0 // pred_check
    _
  $region15: #{trust_network_forward.1} parent=0 // pred_check_branch
    %21 = sbr.rel (0) target = $region17
  $region16: #{trust_network_forward.1} parent=0 // pred_region
    _
  $region17: #{trust_network_forward.1} parent=0 // pred_fallthru
    _
  // Predicated region
  $region18: #{trust_network_forward.1} parent=0 // pred_check
    _
  $region19: #{trust_network_forward.1} parent=0 // pred_check_branch
    %23 = sbr.rel (0) target = $region21
  $region20: #{trust_network_forward.1} parent=0 // pred_region
    _
  $region21: #{trust_network_forward.1} parent=0 // pred_fallthru
    _
  // Predicated region
  $region22: #{trust_network_forward.1} parent=0 // pred_check
    _
  $region23: #{trust_network_forward.1} parent=0 // pred_check_branch
    %25 = sbr.rel (0) target = $region25
  $region24: #{trust_network_forward.1} parent=0 // pred_region
    _
  $region25: #{trust_network_forward.1} parent=0 // pred_fallthru
    _
  // Predicated region
  $region26: #{trust_network_forward.1} parent=0 // pred_check
    _
  $region27: #{trust_network_forward.1} parent=0 // pred_check_branch
    %27 = sbr.rel (0) target = $region29
  $region28: #{trust_network_forward.1} parent=0 // pred_region
    _
  $region29: #{trust_network_forward.1} parent=0 // pred_fallthru
    _
  %v29 = vld [vmem:[%s1] sm:$0xf]
  %v30 = vld [vmem:[%s1 + $0x4] sm:$0xf]
  %v31 = vld [vmem:[%s1 + $0x8] sm:$0xf]
  %v32 = vld [vmem:[%s1 + $0xc] sm:$0xf]
  %v33 = vld [vmem:[%s1 + $0x10] sm:$0xf]
  %v34 = vld [vmem:[%s1 + $0x14] sm:$0xf]
  %v35 = vld [vmem:[%s1 + $0x18] sm:$0xf]
  %v36 = vld [vmem:[%s1 + $0x1c] sm:$0xf]
  %v37 = vld [vmem:[%s0] sm:$0xf]
  %v38 = vld [vmem:[%s0 + $0x4] sm:$0xf]
  %v39 = vld [vmem:[%s2] sm:$0xff]
  %v40 = vld [vmem:[%s2 + $0x8] sm:$0xff]
  %v41 = vld [vmem:[%s2 + $0x10] sm:$0xff]
  %v42 = vld [vmem:[%s2 + $0x18] sm:$0xff]
  %v43 = vld [vmem:[%s2 + $0x20] sm:$0xff]
  %v44 = vld [vmem:[%s2 + $0x28] sm:$0xff]
  %v45 = vld [vmem:[%s2 + $0x30] sm:$0xff]
  %v46 = vld [vmem:[%s2 + $0x38] sm:$0xff]
  %48 = vset.pattern.permute.xlu0 0
  %49 = vperm.xlu0 %48, %v39
  %v50 = vpop.permute.xlu0 %49
  %53 = vset.pattern.permute.xlu0 0
  %54 = vperm.xlu0 %53, %v40
  %v55 = vpop.permute.xlu0 %54
  %58 = vset.pattern.permute.xlu0 0
  %59 = vperm.xlu0 %58, %v41
  %v60 = vpop.permute.xlu0 %59
  %63 = vset.pattern.permute.xlu0 0
  %64 = vperm.xlu0 %63, %v42
  %v65 = vpop.permute.xlu0 %64
  %68 = vset.pattern.permute.xlu0 0
  %69 = vperm.xlu0 %68, %v43
  %v70 = vpop.permute.xlu0 %69
  %73 = vset.pattern.permute.xlu0 0
  %74 = vperm.xlu0 %73, %v44
  %v75 = vpop.permute.xlu0 %74
  %78 = vset.pattern.permute.xlu0 0
  %79 = vperm.xlu0 %78, %v45
  %v80 = vpop.permute.xlu0 %79
  %83 = vset.pattern.permute.xlu0 0
  %84 = vperm.xlu0 %83, %v46
  %v85 = vpop.permute.xlu0 %84
  %v95 = vunpack.c.l.b16 %v29
  %v96 = vunpack.c.l.b16 %v30
  %v97 = vunpack.c.l.b16 %v31
  %v98 = vunpack.c.l.b16 %v32
  %v99 = vunpack.c.l.b16 %v33
  %v100 = vunpack.c.l.b16 %v34
  %v101 = vunpack.c.l.b16 %v35
  %v102 = vunpack.c.l.b16 %v36
  %v103 = vpack.c.b16 %v96, %v95
  %v104 = vpack.c.b16 %v98, %v97
  %v105 = vpack.c.b16 %v100, %v99
  %v106 = vpack.c.b16 %v102, %v101
  %v109 = vunpack.c.l.b16 %v37
  %v110 = vunpack.c.l.b16 %v38
  %v111 = vpack.c.b16 %v110, %v109
  %vm113 = vcmask 130048
  %v115 = vsel %vm113, %v103, 0
  %v118 = vsel %vm113, %v104, 0
  %v121 = vsel %vm113, %v105, 0
  %v124 = vsel %vm113, %v106, 0
  %126 = vmatpush.bf16.msra.mxu0 0
  %127 = vmatpush.bf16.msra.mxu0 0
  %128 = vmatpush.bf16.msra.mxu0 0
  %129 = vmatpush.bf16.msra.mxu0 0
  %130 = vmatpush.bf16.msra.mxu0 0
  %131 = vmatpush.bf16.msra.mxu0 0
  %132 = vmatpush.bf16.msra.mxu0 0
  %133 = vmatpush.bf16.msra.mxu0 %v111
  %134 = vmatmul.bf16.gmra.mxu0 %v115
  %v135 = vpop.f32.mrf.mxu0
  %v136 = vadd.f32 %v50, %v135
  %v137 = vpop.f32.mrf.mxu0
  %v138 = vadd.f32 %v55, %v137
  %139 = vmatmul.bf16.gmra.mxu0 %v118
  %v140 = vpop.f32.mrf.mxu0
  %v141 = vadd.f32 %v60, %v140
  %v142 = vpop.f32.mrf.mxu0
  %v143 = vadd.f32 %v65, %v142
  %144 = vmatmul.bf16.gmra.mxu0 %v121
  %v145 = vpop.f32.mrf.mxu0
  %v146 = vadd.f32 %v70, %v145
  %v147 = vpop.f32.mrf.mxu0
  %v148 = vadd.f32 %v75, %v147
  %149 = vmatmul.bf16.gmra.mxu0 %v124
  %v150 = vpop.f32.mrf.mxu0
  %v151 = vadd.f32 %v80, %v150
  %v152 = vpop.f32.mrf.mxu0
  %v153 = vadd.f32 %v85, %v152
  %154 = vdwg.mxu0
  %v155 = vmax.f32 %v136, 0.0
  %v156 = vmax.f32 %v138, 0.0
  %v157 = vmax.f32 %v141, 0.0
  %v158 = vmax.f32 %v143, 0.0
  %v159 = vmax.f32 %v146, 0.0
  %v160 = vmax.f32 %v148, 0.0
  %v161 = vmax.f32 %v151, 0.0
  %v162 = vmax.f32 %v153, 0.0
  %v163 = vld [vmem:[%s3] sm:$0xf]
  %v164 = vld [vmem:[%s3 + $0x4] sm:$0xf]
  %v165 = vld [vmem:[%s3 + $0x8] sm:$0xf]
  %v166 = vld [vmem:[%s3 + $0xc] sm:$0xf]
  %v167 = vpack.c.bf16 %v156, %v155
  %v168 = vpack.c.bf16 %v158, %v157
  %v169 = vpack.c.bf16 %v160, %v159
  %v170 = vpack.c.bf16 %v162, %v161
  %v171 = vld [vmem:[%s4] sm:$0xff]
  %v172 = vld [vmem:[%s4 + $0x8] sm:$0xff]
  %v173 = vld [vmem:[%s4 + $0x10] sm:$0xff]
  %v174 = vld [vmem:[%s4 + $0x18] sm:$0xff]
  %176 = vset.pattern.permute.xlu0 0
  %177 = vperm.xlu0 %176, %v171
  %v178 = vpop.permute.xlu0 %177
  %181 = vset.pattern.permute.xlu0 0
  %182 = vperm.xlu0 %181, %v172
  %v183 = vpop.permute.xlu0 %182
  %186 = vset.pattern.permute.xlu0 0
  %187 = vperm.xlu0 %186, %v173
  %v188 = vpop.permute.xlu0 %187
  %191 = vset.pattern.permute.xlu0 0
  %192 = vperm.xlu0 %191, %v174
  %v193 = vpop.permute.xlu0 %192
  %v199 = vunpack.c.l.b16 %v163
  %v200 = vunpack.c.l.b16 %v164
  %v201 = vunpack.c.l.b16 %v165
  %v202 = vunpack.c.l.b16 %v166
  %v203 = vpack.c.b16 %v200, %v199
  %v204 = vpack.c.b16 %v202, %v201
  %vm205 = vcmask 523264
  %v207 = vsel %vm205, %v203, 0
  %v210 = vsel %vm205, %v204, 0
  %212 = vmatpush.bf16.msra.mxu0 0
  %213 = vmatpush.bf16.msra.mxu0 0
  %214 = vmatpush.bf16.msra.mxu0 0
  %215 = vmatpush.bf16.msra.mxu0 0
  %216 = vmatpush.bf16.msra.mxu0 %v170
  %217 = vmatpush.bf16.msra.mxu0 %v169
  %218 = vmatpush.bf16.msra.mxu0 %v168
  %219 = vmatpush.bf16.msra.mxu0 %v167
  %220 = vmatmul.bf16.gmra.mxu0 %v207
  %v221 = vpop.f32.mrf.mxu0
  %v222 = vadd.f32 %v178, %v221
  %v223 = vpop.f32.mrf.mxu0
  %v224 = vadd.f32 %v183, %v223
  %225 = vmatmul.bf16.gmra.mxu0 %v210
  %v226 = vpop.f32.mrf.mxu0
  %v227 = vadd.f32 %v188, %v226
  %v228 = vpop.f32.mrf.mxu0
  %v229 = vadd.f32 %v193, %v228
  %230 = vdwg.mxu0
  %v231 = vmax.f32 %v222, 0.0
  %v232 = vmax.f32 %v224, 0.0
  %v233 = vmax.f32 %v227, 0.0
  %v234 = vmax.f32 %v229, 0.0
  %v235 = vld [vmem:[%s5] sm:$0xff]
  %v236 = vld [vmem:[%s5 + $0x8] sm:$0xff]
  %v237 = vld [vmem:[%s5 + $0x10] sm:$0xff]
  %v238 = vld [vmem:[%s5 + $0x18] sm:$0xff]
  %240 = vset.pattern.permute.xlu0 0
  %241 = vperm.xlu0 %240, %v235
  %v242 = vpop.permute.xlu0 %241
  %245 = vset.pattern.permute.xlu0 0
  %246 = vperm.xlu0 %245, %v236
  %v247 = vpop.permute.xlu0 %246
  %250 = vset.pattern.permute.xlu0 0
  %251 = vperm.xlu0 %250, %v237
  %v252 = vpop.permute.xlu0 %251
  %255 = vset.pattern.permute.xlu0 0
  %256 = vperm.xlu0 %255, %v238
  %v257 = vpop.permute.xlu0 %256
  %v259 = vmul.f32 %v231, %v242
  %v260 = vmul.f32 %v232, %v247
  %v261 = vmul.f32 %v233, %v252
  %v262 = vmul.f32 %v234, %v257
  %v263 = vadd.f32 %v259, %v260
  %v264 = vadd.f32 %v263, %v261
  %v265 = vadd.f32 %v264, %v262
  %v266 = vrot.slane %v265, 4
  %v267 = vadd.f32 %v265, %v266
  %v268 = vrot.slane %v267, 2
  %v269 = vadd.f32 %v267, %v268
  %v270 = vrot.slane %v269, 1
  %v271 = vadd.f32 %v269, %v270
  %v272 = vld [vmem:[#allocation2] sm:$0x1]
  %274 = vset.pattern.permute.xlu0 0
  %275 = vperm.xlu0 %274, %v272
  %v276 = vpop.permute.xlu0 %275
  %v278 = vperm.slane %v276, 0
  %v279 = vadd.f32 %v271, %v278
  %v280 = vxor.u32 %v279, 2147483648
  %v281 = vmul.f32 %v280, 1.442695
  %v282 = vpow.pop %v281
  %v283 = vadd.f32 %v282, 1.0
  %v284 = vrcp.pop %v283
  %v285 = vmul.f32 %v283, %v284
  %v286 = vsub.f32 1.0, %v285
  %v287 = vmul.f32 %v284, %v286
  %v288 = vadd.f32 %v284, %v287
  %vm289 = vweird.f32 %v283
  %vm290 = vweird.f32 %v284
  %vm291 = vmor %vm289, %vm290
  %v292 = vsel %vm291, %v284, %v288
  %v293 = vand.u32 2147483647, %v283
  %vm294 = vcmp.eq.f32.partialorder %v293, 8.507059e+37
  %v295 = vand.u32 %v283, 2147483648
  %v296 = vor.u32 1.1754944e-38, %v295
  %v297 = vsel %vm294, %v296, %v292
  %v298 = vmul.f32 1.0, %v297
  %299 = vst [vmem:[%s7] sm:$0x1] %v298
  // Predicated region
  $region30: #{trust_network_forward.1} parent=0 // pred_check
    _
  $region31: #{trust_network_forward.1} parent=0 // pred_check_branch
    %301 = sbr.rel (0) target = $region33
  $region32: #{trust_network_forward.1} parent=0 // pred_region
    _
  $region33: #{trust_network_forward.1} parent=0 // pred_fallthru
    _
  // Predicated region
  $region34: #{trust_network_forward.1} parent=0 // pred_check
    _
  $region35: #{trust_network_forward.1} parent=0 // pred_check_branch
    %303 = sbr.rel (0) target = $region37
  $region36: #{trust_network_forward.1} parent=0 // pred_region
    _
  $region37: #{trust_network_forward.1} parent=0 // pred_fallthru
    _

</llo_original>
